<compile_context>
chip_gen: v7x
topology: tpu7x:2x2x1
jax: 0.10.0
libtpu: 0.0.40
codegen_flags: <defaults>
</compile_context>

<pallas_src>
import functools

import jax
import jax.numpy as jnp
from jax.experimental import pallas as pl
from jax.experimental.pallas import tpu as pltpu


_SMALL_INPUT_ELEMS = 128 * 1024  # below this, fused jnp.where beats a kernel launch


def _thresholded_relu_kernel(x_ref, o_ref, *, theta, fill):
    # Pure VPU elementwise: one compare + one select per vreg; mem-bound kernel.
    x = x_ref[...]
    o_ref[...] = jnp.where(x > theta, x, jnp.full_like(x, fill))


def _round_up(v, mult):
    return ((v + mult - 1) // mult) * mult


def _per_block_budget_bytes():
    """VMEM budget for ONE pipeline buffer (Pallas double-buffers in + out => 4x this)."""
    try:
        kind = jax.devices()[0].device_kind.lower()
    except Exception:
        kind = ""
    # v5e (and older) default scoped-VMEM limit is 16 MiB: keep 4 x 2 MiB buffers.
    if any(v in kind for v in ("v2", "v3", "v4", "v5")):
        return 2 << 20
    # v6e / v7x: 32 MiB default scoped limit -> 4 x 4 MiB of pipeline buffers.
    return 4 << 20


def thresholded_relu(x, theta=1.0, fill=0.001, *, donate=False, force_pallas=False):
    """Pallas TPU ThresholdedReLU: where(x > theta, x, fill), any shape/dtype."""
    # Small-input fast path: let XLA fuse the one-op elementwise into its neighbours.
    if x.size < _SMALL_INPUT_ELEMS and not force_pallas:
        return jnp.where(x > theta, x, jnp.full_like(x, fill))

    orig_shape = x.shape
    if x.ndim == 0:
        x2 = x.reshape(1, 1)
    elif x.ndim == 1:
        x2 = x.reshape(1, -1)
    else:
        x2 = x.reshape(-1, x.shape[-1])  # free: row-major collapse of leading dims
    m, n = x2.shape

    itemsize = jnp.dtype(x2.dtype).itemsize
    sub = max(8, 32 // max(itemsize, 1))  # sublane alignment: 8 f32 / 16 bf16 / 32 int8
    budget = _per_block_budget_bytes()

    # Lane (last-dim) tiling: prefer the FULL row -> one contiguous DMA per block,
    # no padding, masked stores only on the natural lane remainder.  Only tile
    # lanes if even a minimal aligned row-strip would blow the per-buffer budget.
    if n <= 128 or n * itemsize * sub <= budget:
        tn = n  # block dim equal to the full array dim is always legal
    else:
        tn = max(128, (budget // (sub * itemsize)) // 128 * 128)

    # Row tiling: biggest sublane-aligned strip that fits the per-buffer budget.
    rows_fit = max(sub, (budget // max(tn * itemsize, 1)) // sub * sub)
    if m <= sub:
        tm = m  # single block equal to full dim
    else:
        tm = min(rows_fit, (m // sub) * sub)
        # Keep >= 2 grid steps so both v7x TensorCores get work (also gives the
        # pipeline a prefetch step on single-core chips; harmless).
        if pl.cdiv(m, tm) < 2:
            tm = max(sub, _round_up(pl.cdiv(m, 2), sub))

    grid = (pl.cdiv(m, tm), pl.cdiv(n, tn))

    out = pl.pallas_call(
        functools.partial(_thresholded_relu_kernel, theta=float(theta), fill=float(fill)),
        out_shape=jax.ShapeDtypeStruct((m, n), x2.dtype),
        grid_spec=pltpu.PrefetchScalarGridSpec(
            num_scalar_prefetch=0,
            grid=grid,
            in_specs=[pl.BlockSpec((tm, tn), lambda i, j: (i, j))],
            out_specs=pl.BlockSpec((tm, tn), lambda i, j: (i, j)),
        ),
        compiler_params=pltpu.CompilerParams(
            dimension_semantics=("parallel", "parallel")),
        input_output_aliases={0: 0} if donate else {},
    )(x2)

    return out.reshape(orig_shape)


if __name__ == "__main__":
    key = jax.random.PRNGKey(0)
    k1, k2, k3 = jax.random.split(key, 3)

    # Small shapes consistent with the (purely elementwise) module:
    #  - 4D activation tensor (batch=2, channels=4, spatial=16x16), theta=0.24 as in the GAT model,
    #  - 2D tensor with a non-128-multiple last dim (exercises the full-width masked-lane path),
    #  - a tiny tensor that takes the fused-jnp.where fast path.
    x1 = 2.0 * jax.random.normal(k1, (2, 4, 16, 16), jnp.float32)
    x2 = 2.0 * jax.random.normal(k2, (16, 115), jnp.float32)
    x3 = 2.0 * jax.random.normal(k3, (8, 32), jnp.float32)

    cases = [
        (x1, 0.24, True),   # Pallas path: grid split over rows, contiguous full-width blocks
        (x2, 1.00, True),   # Pallas path: full-width lanes (115, not a 128 multiple)
        (x3, 1.00, False),  # small-input fast path (fused jnp.where)
    ]

    for x, theta, force in cases:
        y = jax.block_until_ready(
            thresholded_relu(x, theta=theta, fill=0.001, force_pallas=force))
        ref = jnp.where(x > theta, x, jnp.full_like(x, 0.001))
        assert y.shape == x.shape and y.dtype == x.dtype
        assert jnp.array_equal(y, ref), "Pallas ThresholdedReLU mismatch vs reference"

    print("KERNEL_OK")
</pallas_src>

<mosaic_0001>
module attributes {stable_mosaic.version = 11 : i64} {
  func.func @_thresholded_relu_kernel(%arg0: i32, %arg1: i32, %arg2: memref<64x16xf32, #tpu.memory_space<vmem>>, %arg3: memref<64x16xf32, #tpu.memory_space<vmem>>) attributes {dimension_semantics = [#tpu.dimension_semantics<parallel>, #tpu.dimension_semantics<parallel>], iteration_bounds = array<i64: 2, 1>, scalar_prefetch = 0 : i64, scratch_operands = 0 : i64, tpu.core_type = #tpu.core_type<tc>, window_params = [{transform_indices = @transform_0, window_bounds = array<i64: 64, 16>}, {transform_indices = @transform_1, window_bounds = array<i64: 64, 16>}]} {
    %c0 = arith.constant 0 : index
    %c0_0 = arith.constant 0 : index
    %0 = vector.load %arg2[%c0, %c0_0] : memref<64x16xf32, #tpu.memory_space<vmem>>, vector<64x16xf32>
    %cst = arith.constant 2.400000e-01 : f32
    %1 = vector.broadcast %cst : f32 to vector<64x16xf32>
    %2 = arith.cmpf ogt, %0, %1 : vector<64x16xf32>
    %cst_1 = arith.constant 1.000000e-03 : f32
    %3 = vector.broadcast %cst_1 : f32 to vector<64x16xf32>
    %4 = arith.select %2, %0, %3 : vector<64x16xi1>, vector<64x16xf32>
    %c0_2 = arith.constant 0 : index
    %c0_3 = arith.constant 0 : index
    %5 = vector.load %arg3[%c0_2, %c0_3] : memref<64x16xf32, #tpu.memory_space<vmem>>, vector<64x16xf32>
    tpu.vector_store %arg3[%c0_2, %c0_3], %4 {strides = array<i32>} : memref<64x16xf32, #tpu.memory_space<vmem>>, vector<64x16xf32>,
    return
  }
  func.func @transform_0(%arg0: i32, %arg1: i32) -> (i32, i32) {
    %c0_i32 = arith.constant 0 : i32
    return %arg0, %arg1 : i32, i32
  }
  func.func @transform_1(%arg0: i32, %arg1: i32) -> (i32, i32) {
    %c0_i32 = arith.constant 0 : i32
    return %arg0, %arg1 : i32, i32
  }
}

</mosaic_0001>

<llo_original>
// kernel: tpu_custom_call.1
$region0: #{tpu_custom_call.1}
  #allocation0 [shape = 'u32[]', space=smem, size = 0x4, offset = 0x4, fixed_abs, tag = 'smem constant byte address 0x4 - core index']
  #allocation1 [shape = 'u32[144,128]{1,0:T(1,128)}', space=vmem, size = 0x12000, scoped, tag = 'internal scratch']
  %s0 = inlined_call_operand.vmem [shape: f32[128,16], index: 0, kind: input, shape index: {}]
  %s1 = inlined_call_operand.vmem [shape: f32[128,16], index: 1, kind: output, shape index: {}]
  %s2 = sld [smem:[#allocation0]]
  $region37: #{tpu_custom_call.1} parent=0
    _
  %s4 = ssub.s32 1, %s2
  %s5 = scalar_select 0, %s4, %s2
  loop: start=0, step=1, limit=4
  $region2: #{tpu_custom_call.1} parent=0 // loop_pre_header
    _
  $region3: #{tpu_custom_call.1} parent=0 // loop_header
    %s7 = sphi 0, %s11
    %p8 = scmp.ge.s32.totalorder %s7, 4
    %s14 = sphi 0, %s26
    %s15 = sphi 0, %s22
    %s16 = sphi 0, %s14
    %s17 = sphi 0, %s15
    %s18 = sphi 0, %s16
    %s19 = sphi 0, %s17
    %s31 = sphi 0, %s33
    %s34 = sphi 0, %s31
    %s35 = sphi 0, %s34
    %s51 = sphi 0, %s35
    %s59 = sphi 0, %s61
    %s62 = sphi 0, %s59
    %s63 = sphi 0, %s62
    %s79 = sphi 0, %s63
  $region4: #{tpu_custom_call.1} parent=0 // loop_header_branch
    %10 = sbr.rel (%p8) target = $region8
  $region5: #{tpu_custom_call.1} parent=0 // loop_body
    %s12 = ssub.s32 %s7, 1
    %s13 = ssub.s32 %s7, 2
    %s20 = sadd.s32 1, %s15
    %p21 = scmp.ge.s32.totalorder %s20, 1
    %s22 = scalar_select %p21, 0, %s20
    %s23 = sadd.s32 1, %s14
    %s24 = scalar_select %p21, %s23, %s14
    %p25 = scmp.ge.s32.totalorder %s24, 2
    %s26 = scalar_select %p25, 0, %s24
    %s27 = ssub.s32 %s14, %s26
    %s28 = ssub.s32 %s15, %s22
    %s29 = sor.u32 %s27, %s28
    %p30 = scmp.eq.s32.totalorder %s29, 0
    %s32 = sadd.s32 %s31, 1
    %s33 = scalar_select %p30, %s31, %s32
    %p36 = pneg %p30
    %p37 = scmp.eq.s32.totalorder %s7, 1
    %p38 = por %p36, %p37
    %p39 = scmp.ne.s32.totalorder %s31, %s34
    %p40 = scmp.eq.s32.totalorder %s7, 0
    %p41 = por %p39, %p40
    %p42 = scmp.ne.s32.totalorder %s31, %s34
    %p43 = scmp.eq.s32.totalorder %s12, 1
    %p44 = por %p42, %p43
    %p45 = scmp.ne.s32.totalorder %s34, %s35
    %p46 = scmp.eq.s32.totalorder %s12, 0
    %p47 = por %p45, %p46
    %p48 = scmp.ne.s32.totalorder %s34, %s35
    %p49 = scmp.eq.s32.totalorder %s13, 1
    %p50 = por %p48, %p49
    %p52 = scmp.ne.s32.totalorder %s35, %s51
    %p53 = scmp.eq.s32.totalorder %s13, 0
    %p54 = por %p52, %p53
    %s55 = ssub.s32 %s14, %s26
    %s56 = ssub.s32 %s15, %s22
    %s57 = sor.u32 %s55, %s56
    %p58 = scmp.eq.s32.totalorder %s57, 0
    %s60 = sadd.s32 %s59, 1
    %s61 = scalar_select %p58, %s59, %s60
    %p64 = pneg %p58
    %p65 = scmp.eq.s32.totalorder %s7, 1
    %p66 = por %p64, %p65
    %p67 = scmp.ne.s32.totalorder %s59, %s62
    %p68 = scmp.eq.s32.totalorder %s7, 0
    %p69 = por %p67, %p68
    %p70 = scmp.ne.s32.totalorder %s59, %s62
    %p71 = scmp.eq.s32.totalorder %s12, 1
    %p72 = por %p70, %p71
    %p73 = scmp.ne.s32.totalorder %s62, %s63
    %p74 = scmp.eq.s32.totalorder %s12, 0
    %p75 = por %p73, %p74
    %p76 = scmp.ne.s32.totalorder %s62, %s63
    %p77 = scmp.eq.s32.totalorder %s13, 1
    %p78 = por %p76, %p77
    %p80 = scmp.ne.s32.totalorder %s63, %s79
    %p81 = scmp.eq.s32.totalorder %s13, 0
    %p82 = por %p80, %p81
    %p83 = scmp.le.s32.totalorder 1, %s7
    %p84 = scmp.lt.s32.totalorder %s7, 3
    %p85 = pnand %p83, %p84
    %p86 = pneg %p85
    // Predicated region
    $region9: #{tpu_custom_call.1} parent=5 // pred_check
      _
    $region10: #{tpu_custom_call.1} parent=5 // pred_check_branch
      %88 = sbr.rel (%p85) target = $region12
    $region11: #{tpu_custom_call.1} parent=5 // pred_region
      %s89 = ssub.s32 %s7, 1
    $region12: #{tpu_custom_call.1} parent=5 // pred_fallthru
      _
    %p90 = scmp.lt.s32.totalorder %s7, 2
    // Predicated region
    $region13: #{tpu_custom_call.1} parent=5 // pred_check
      %p91 = pneg %p90
    $region14: #{tpu_custom_call.1} parent=5 // pred_check_branch
      %93 = sbr.rel (%p91) target = $region16
    $region15: #{tpu_custom_call.1} parent=5 // pred_region
      // Predicated region
      $region17: #{tpu_custom_call.1} parent=15 // pred_check
        %p94 = pneg %p41
      $region18: #{tpu_custom_call.1} parent=15 // pred_check_branch
        %96 = sbr.rel (%p94) target = $region20
      $region19: #{tpu_custom_call.1} parent=15 // pred_region
        %s97 = smul.u32 8, %s14
        %p98 = scmp.lt.s32.totalorder %s97, 15
        %s99 = scalar_select %p98, %s97, 15
        %p100 = scmp.lt.s32.totalorder %s15, 0
        %s101 = scalar_select %p100, %s15, 0
        %s102 = sadd.s32 %s101, %s99
        %s103 = smul.addr %s102, 8
        %s104 = scalar_lea.vmem %s0, %s103
        %s105 = smul.u32 8, %s14
      $region20: #{tpu_custom_call.1} parent=15 // pred_fallthru
        _
    $region16: #{tpu_custom_call.1} parent=5 // pred_fallthru
      _
    %p106 = scmp.le.s32.totalorder 1, %s7
    %p107 = scmp.lt.s32.totalorder %s7, 3
    %p108 = pnand %p106, %p107
    %p109 = pneg %p108
    // Predicated region
    $region21: #{tpu_custom_call.1} parent=5 // pred_check
      _
    $region22: #{tpu_custom_call.1} parent=5 // pred_check_branch
      %111 = sbr.rel (%p108) target = $region24
    $region23: #{tpu_custom_call.1} parent=5 // pred_region
      %s112 = ssub.s32 %s7, 1
      %s113 = smul.u32 8, %s16
      %p114 = scmp.lt.s32.totalorder %s113, 15
      %s115 = scalar_select %p114, %s113, 15
      %p116 = scmp.lt.s32.totalorder %s17, 0
      %s117 = scalar_select %p116, %s17, 0
      %s118 = sadd.s32 %s117, %s115
      %s119 = smul.addr %s118, 8
      %s120 = scalar_lea.vmem %s0, %s119
      %p121 = pneg %p47
      %p122 = pneg %p44
      %p123 = pneg %p75
      %p124 = pneg %p72
      %s125 = smul.u32 8, %s16
      %p126 = scmp.lt.s32.totalorder %s125, 15
      %s127 = scalar_select %p126, %s125, 15
      %p128 = scmp.lt.s32.totalorder %s17, 0
      %s129 = scalar_select %p128, %s17, 0
      %s130 = sadd.s32 %s129, %s127
      %s131 = smul.addr %s130, 8
      %s132 = scalar_lea.vmem %s1, %s131
      %s133 = smul.u32 8, %s16
      %p134 = scmp.lt.s32.totalorder %s133, 15
      %s135 = scalar_select %p134, %s133, 15
      %p136 = scmp.lt.s32.totalorder %s17, 0
      %s137 = scalar_select %p136, %s17, 0
      %s138 = sadd.s32 %s137, %s135
      %s139 = smul.addr %s138, 8
      %s140 = scalar_lea.vmem %s0, %s139
      %s141 = smul.u32 8, %s16
      %s142 = smul.u32 8, %s16
      %p143 = scmp.lt.s32.totalorder %s142, 15
      %s144 = scalar_select %p143, %s142, 15
      %p145 = scmp.lt.s32.totalorder %s17, 0
      %s146 = scalar_select %p145, %s17, 0
      %s147 = sadd.s32 %s146, %s144
      %s148 = smul.addr %s147, 8
      %s149 = scalar_lea.vmem %s1, %s148
      %s150 = smul.u32 8, %s16
      %v151 = vld [vmem:[%s140] sm:$0xff]
      %v152 = vld [vmem:[%s140 + $0x8] sm:$0xff]
      %v153 = vld [vmem:[%s140 + $0x10] sm:$0xff]
      %v154 = vld [vmem:[%s140 + $0x18] sm:$0xff]
      %v155 = vld [vmem:[%s140 + $0x20] sm:$0xff]
      %v156 = vld [vmem:[%s140 + $0x28] sm:$0xff]
      %v157 = vld [vmem:[%s140 + $0x30] sm:$0xff]
      %v158 = vld [vmem:[%s140 + $0x38] sm:$0xff]
      %vm159 = vcmp.gt.f32.partialorder %v151, 0.24
      %vm160 = vcmp.gt.f32.partialorder %v152, 0.24
      %vm161 = vcmp.gt.f32.partialorder %v153, 0.24
      %vm162 = vcmp.gt.f32.partialorder %v154, 0.24
      %vm163 = vcmp.gt.f32.partialorder %v155, 0.24
      %vm164 = vcmp.gt.f32.partialorder %v156, 0.24
      %vm165 = vcmp.gt.f32.partialorder %v157, 0.24
      %vm166 = vcmp.gt.f32.partialorder %v158, 0.24
      %v167 = vsel %vm159, %v151, 0.001
      %v168 = vsel %vm160, %v152, 0.001
      %v169 = vsel %vm161, %v153, 0.001
      %v170 = vsel %vm162, %v154, 0.001
      %v171 = vsel %vm163, %v155, 0.001
      %v172 = vsel %vm164, %v156, 0.001
      %v173 = vsel %vm165, %v157, 0.001
      %v174 = vsel %vm166, %v158, 0.001
      %vm175 = vcmask 130048
      %176 = vst.msk [vmem:[%s149] sm:$0xff] %vm175, %v167
      %177 = vst.msk [vmem:[%s149 + $0x8] sm:$0xff] %vm175, %v168
      %178 = vst.msk [vmem:[%s149 + $0x10] sm:$0xff] %vm175, %v169
      %179 = vst.msk [vmem:[%s149 + $0x18] sm:$0xff] %vm175, %v170
      %180 = vst.msk [vmem:[%s149 + $0x20] sm:$0xff] %vm175, %v171
      %181 = vst.msk [vmem:[%s149 + $0x28] sm:$0xff] %vm175, %v172
      %182 = vst.msk [vmem:[%s149 + $0x30] sm:$0xff] %vm175, %v173
      %183 = vst.msk [vmem:[%s149 + $0x38] sm:$0xff] %vm175, %v174
      %s184 = smul.u32 8, %s16
      %p185 = scmp.lt.s32.totalorder %s184, 15
      %s186 = scalar_select %p185, %s184, 15
      %p187 = scmp.lt.s32.totalorder %s17, 0
      %s188 = scalar_select %p187, %s17, 0
      %s189 = sadd.s32 %s188, %s186
      %s190 = smul.addr %s189, 8
      %s191 = scalar_lea.vmem %s1, %s190
      // Predicated region
      $region25: #{tpu_custom_call.1} parent=23 // pred_check
        %p192 = pneg %p72
      $region26: #{tpu_custom_call.1} parent=23 // pred_check_branch
        %194 = sbr.rel (%p192) target = $region28
      $region27: #{tpu_custom_call.1} parent=23 // pred_region
        %s195 = smul.u32 8, %s16
      $region28: #{tpu_custom_call.1} parent=23 // pred_fallthru
        _
    $region24: #{tpu_custom_call.1} parent=5 // pred_fallthru
      _
    %p196 = scmp.le.s32.totalorder 2, %s7
    // Predicated region
    $region29: #{tpu_custom_call.1} parent=5 // pred_check
      %p197 = pneg %p196
    $region30: #{tpu_custom_call.1} parent=5 // pred_check_branch
      %199 = sbr.rel (%p197) target = $region32
    $region31: #{tpu_custom_call.1} parent=5 // pred_region
      %s200 = ssub.s32 %s7, 2
      // Predicated region
      $region33: #{tpu_custom_call.1} parent=31 // pred_check
        %p201 = pneg %p78
      $region34: #{tpu_custom_call.1} parent=31 // pred_check_branch
        %203 = sbr.rel (%p201) target = $region36
      $region35: #{tpu_custom_call.1} parent=31 // pred_region
        %s204 = smul.u32 8, %s18
        %p205 = scmp.lt.s32.totalorder %s204, 15
        %s206 = scalar_select %p205, %s204, 15
        %p207 = scmp.lt.s32.totalorder %s19, 0
        %s208 = scalar_select %p207, %s19, 0
        %s209 = sadd.s32 %s208, %s206
        %s210 = smul.addr %s209, 8
        %s211 = scalar_lea.vmem %s1, %s210
      $region36: #{tpu_custom_call.1} parent=31 // pred_fallthru
        _
    $region32: #{tpu_custom_call.1} parent=5 // pred_fallthru
      _
  $region6: #{tpu_custom_call.1} parent=0 // loop_footer
    %s11 = sadd.s32 1, %s7
  $region7: #{tpu_custom_call.1} parent=0 // loop_footer_branch
    %6 = sbr.rel target = $region3
  $region8: #{tpu_custom_call.1} parent=0 // loop_exit
    _

</llo_original>
